<compile_context>
chip_gen: v5e
topology: v5e:2x2
jax: 0.10.0
libtpu: 0.0.40
codegen_flags: <defaults>
</compile_context>

<pallas_src>
import functools

import jax
import jax.numpy as jnp
from jax import lax
from jax.experimental import pallas as pl
from jax.experimental.pallas import tpu as pltpu


def po_kernel(t_ref, cb_ref, w_ref, out_ref, *, seq_len):
    # t_ref : [rows, 128]  bf16  per-token features (cols E:128 zero)
    # cb_ref: [rows, 128]  f32   per-row conv bias (conv bias + masked constant-tap
    #                            contributions in cols 0:E; col 127 == 1.0 so the
    #                            bias row of the weight slab acts as the fc bias)
    # w_ref : [128, 512]   bf16  cols   0:384 -> 3 conv taps (token rows), 128/tap
    #                            cols 384:512 -> fused fc heads (+ bias row at 127)
    # out_ref:[rows, 128]  f32   head1 at cols 0:NC, head2 at cols 64:64+NC
    rows = t_ref.shape[0]

    # Fused per-token contribution of the three conv taps: [rows, 384].
    z = jnp.dot(t_ref[...], w_ref[:, 0:384], preferred_element_type=jnp.float32)
    z0 = z[:, 0:128]      # tap applied to h[s-1]   (128-aligned slice)
    z1 = z[:, 128:256]    # tap applied to h[s]
    z2 = z[:, 256:384]    # tap applied to h[s+1]

    # Shift along the sequence with sublane rolls; mask sequence boundaries
    # (also covers the batch boundaries inside the flattened row block).
    pos = lax.broadcasted_iota(jnp.int32, (rows, 1), 0) % seq_len
    z0s = jnp.where(pos == 0, 0.0, pltpu.roll(z0, shift=1, axis=0))
    z2s = jnp.where(pos == seq_len - 1, 0.0,
                    pltpu.roll(z2, shift=rows - 1, axis=0))

    # Conv output + ReLU (all f32 on the VPU).
    conv = jnp.maximum(z0s + z1 + z2s + cb_ref[...], 0.0)    # [rows, 128]

    # Fused output heads; the fc bias rides on weight-row 127 via conv[:, 127] == 1.
    out_ref[...] = jnp.dot(conv.astype(w_ref.dtype), w_ref[:, 384:512],
                           preferred_element_type=jnp.float32)


def pack_params(params, word_emb_size):
    """One-time parameter repacking (hoisted out of the per-call forward path)."""
    E = word_emb_size
    NC = params["wp1"].shape[0]          # num_classes + 1
    assert E <= 120 and NC <= 64
    w_conv = params["w_conv"].astype(jnp.float32)            # [E, 4E, 3]

    # bf16 weight slab [128, 512]: 3 conv taps (token rows) + fused fc heads.
    slab = jnp.zeros((128, 512), jnp.float32)
    for k in range(3):
        slab = slab.at[:E, 128 * k:128 * k + E].set(w_conv[:, :E, k].T)
    slab = slab.at[:E, 384:384 + NC].set(params["wp1"].T)
    slab = slab.at[:E, 448:448 + NC].set(params["wp2"].T)
    slab = slab.at[127, 384:384 + NC].set(params["bp1"])     # fc bias row
    slab = slab.at[127, 448:448 + NC].set(params["bp2"])

    # Constant-feature rows of each tap, kept f32 for the wrapper-side bias fold.
    wc = jnp.stack([w_conv[:, E:, k].T for k in range(3)], axis=0)   # [3, 3E, E]

    return {
        "w_slab": slab.astype(jnp.bfloat16),                 # [128, 512] bf16
        "wc": wc,                                            # [3, 3E, E] f32
        "b_conv": params["b_conv"].astype(jnp.float32),      # [E] f32
    }


def po_model_pallas(t, t_max, k1, k2, *, packed, num_classes, batch_block=None):
    """t: [B,S,E] f32, t_max: [B,E] f32, k1/k2: [B,1] int32."""
    B, S, E = t.shape
    NC = num_classes + 1
    BB = B if batch_block is None else batch_block           # default: one fat step
    assert B % BB == 0
    rows = BB * S
    n_steps = B // BB

    # ---- glue (seq_gather) kept in plain XLA: tiny, data-dependent gather ----
    bidx = jnp.arange(B)
    k1v = t[bidx, k1[:, 0]]                                  # [B, E]
    k2v = t[bidx, k2[:, 0]]                                  # [B, E]
    v = jnp.concatenate([t_max, k1v, k2v], axis=-1)          # [B, 3E] f32

    # Fold the per-batch constant-feature path of the conv into a per-row f32 bias
    # (c0/c2 masked at sequence boundaries exactly like the kernel's rolled taps).
    c = jnp.einsum("bf,kfe->kbe", v, packed["wc"])           # [3, B, E]
    pos = jnp.arange(S)
    not_first = (pos != 0)[None, :, None].astype(jnp.float32)
    not_last = (pos != S - 1)[None, :, None].astype(jnp.float32)
    cb = (c[1][:, None, :] + packed["b_conv"][None, None, :]
          + c[0][:, None, :] * not_first
          + c[2][:, None, :] * not_last)                     # [B, S, E]
    cb128 = jnp.zeros((B * S, 128), jnp.float32)
    cb128 = cb128.at[:, :E].set(cb.reshape(B * S, E))
    cb128 = cb128.at[:, 127].set(1.0)                        # enables the fc-bias row

    # Lane-dense bf16 token features (cols E:128 zero).
    t128 = jnp.zeros((B * S, 128), jnp.bfloat16)
    t128 = t128.at[:, :E].set(t.reshape(B * S, E).astype(jnp.bfloat16))

    kern = functools.partial(po_kernel, seq_len=S)
    flops = 2 * B * S * 128 * (384 + 128)
    bytes_accessed = (t128.size * 2 + cb128.size * 4
                      + packed["w_slab"].size * 2 + B * S * 128 * 4)

    out = pl.pallas_call(
        kern,
        out_shape=jax.ShapeDtypeStruct((B * S, 128), jnp.float32),
        grid=(n_steps,),
        in_specs=[
            pl.BlockSpec((rows, 128), lambda b: (b, 0)),     # token features
            pl.BlockSpec((rows, 128), lambda b: (b, 0)),     # per-row conv bias
            pl.BlockSpec((128, 512), lambda b: (0, 0)),      # fused weight slab
        ],
        out_specs=pl.BlockSpec((rows, 128), lambda b: (b, 0)),
        compiler_params=pltpu.CompilerParams(
            dimension_semantics=("parallel",)),
        cost_estimate=pl.CostEstimate(flops=flops, transcendentals=0,
                                      bytes_accessed=bytes_accessed),
    )(t128, cb128, packed["w_slab"])

    out = out.reshape(B, S, 128)
    return out[..., 0:NC], out[..., 64:64 + NC]


def po_model_reference(t, t_max, k1, k2, params):
    """Pure-JAX (f32) reference matching the PyTorch forward."""
    B, S, E = t.shape
    bidx = jnp.arange(B)
    k1v = t[bidx, k1[:, 0]]
    k2v = t[bidx, k2[:, 0]]
    k = jnp.concatenate([k1v, k2v], axis=-1)
    h = jnp.concatenate(
        [t,
         jnp.broadcast_to(t_max[:, None, :], (B, S, E)),
         jnp.broadcast_to(k[:, None, :], (B, S, 2 * E))],
        axis=-1)                                             # [B, S, 4E]
    x = jnp.transpose(h, (0, 2, 1))                          # NCW
    y = lax.conv_general_dilated(
        x, params["w_conv"], window_strides=(1,), padding=((1, 1),),
        dimension_numbers=("NCH", "OIH", "NCH"))
    y = y + params["b_conv"][None, :, None]
    y = jnp.maximum(y, 0.0)
    y = jnp.transpose(y, (0, 2, 1))                          # [B, S, E]
    po1 = y @ params["wp1"].T + params["bp1"]
    po2 = y @ params["wp2"].T + params["bp2"]
    return po1, po2


if __name__ == "__main__":
    # Small shapes consistent with the module: batch=4, seq=16, word_emb_size=16,
    # num_classes=7 (-> num_classes+1 = 8 output units per head).
    B, S, E, NUM_CLASSES = 4, 16, 16, 7
    NC = NUM_CLASSES + 1
    C = 4 * E

    key = jax.random.PRNGKey(0)
    kt, kk1, kk2, kw, kb, kw1, kb1, kw2, kb2 = jax.random.split(key, 9)

    t = jax.random.normal(kt, (B, S, E), dtype=jnp.float32)
    t_max = jnp.max(t, axis=1)                               # [B, E] (as used upstream)
    k1 = jax.random.randint(kk1, (B, 1), 0, S, dtype=jnp.int32)
    k2 = jax.random.randint(kk2, (B, 1), 0, S, dtype=jnp.int32)

    params = {
        "w_conv": 0.1 * jax.random.normal(kw, (E, C, 3), dtype=jnp.float32),
        "b_conv": 0.1 * jax.random.normal(kb, (E,), dtype=jnp.float32),
        "wp1": 0.1 * jax.random.normal(kw1, (NC, E), dtype=jnp.float32),
        "bp1": 0.1 * jax.random.normal(kb1, (NC,), dtype=jnp.float32),
        "wp2": 0.1 * jax.random.normal(kw2, (NC, E), dtype=jnp.float32),
        "bp2": 0.1 * jax.random.normal(kb2, (NC,), dtype=jnp.float32),
    }

    # Parameter repacking done ONCE, outside the per-call forward path.
    packed = pack_params(params, E)

    r1, r2 = po_model_reference(t, t_max, k1, k2, params)

    # Default: single fat grid step (best on single-TC v5e/v6e; also fine on v7x
    # at these tiny sizes).
    fwd = jax.jit(functools.partial(po_model_pallas, packed=packed,
                                    num_classes=NUM_CLASSES))
    po1, po2 = fwd(t, t_max, k1, k2)
    jax.block_until_ready((po1, po2))
    assert po1.shape == (B, S, NC) and po2.shape == (B, S, NC)
    # Tolerances sized for bf16 MXU operands (f32 accumulation / f32 constant path).
    assert jnp.allclose(po1, r1, atol=5e-2, rtol=5e-2), "po1 mismatch (1 step)"
    assert jnp.allclose(po2, r2, atol=5e-2, rtol=5e-2), "po2 mismatch (1 step)"

    # v7x dual-TC option: two fat "parallel" steps (batch_block = B // 2).
    po1b, po2b = po_model_pallas(t, t_max, k1, k2, packed=packed,
                                 num_classes=NUM_CLASSES, batch_block=B // 2)
    jax.block_until_ready((po1b, po2b))
    assert jnp.allclose(po1b, r1, atol=5e-2, rtol=5e-2), "po1 mismatch (2 steps)"
    assert jnp.allclose(po2b, r2, atol=5e-2, rtol=5e-2), "po2 mismatch (2 steps)"

    print("KERNEL_OK")
</pallas_src>

<mosaic_0001>
module attributes {stable_mosaic.version = 11 : i64} {
  func.func @po_kernel(%arg0: i32, %arg1: memref<64x128xbf16, #tpu.memory_space<vmem>>, %arg2: memref<64x128xf32, #tpu.memory_space<vmem>>, %arg3: memref<128x512xbf16, #tpu.memory_space<vmem>>, %arg4: memref<64x128xf32, #tpu.memory_space<vmem>>) attributes {dimension_semantics = [#tpu.dimension_semantics<parallel>], iteration_bounds = array<i64: 1>, scalar_prefetch = 0 : i64, scratch_operands = 0 : i64, tpu.core_type = #tpu.core_type<tc>, window_params = [{transform_indices = @transform_0, window_bounds = array<i64: 64, 128>}, {transform_indices = @transform_1, window_bounds = array<i64: 64, 128>}, {pipeline_mode = #tpu.pipeline_mode<synchronous>, transform_indices = @transform_2, window_bounds = array<i64: 128, 512>}, {transform_indices = @transform_3, window_bounds = array<i64: 64, 128>}]} {
    %c0 = arith.constant 0 : index
    %c0_0 = arith.constant 0 : index
    %0 = vector.load %arg1[%c0, %c0_0] : memref<64x128xbf16, #tpu.memory_space<vmem>>, vector<64x128xbf16>
    %c0_1 = arith.constant 0 : index
    %c0_2 = arith.constant 0 : index
    %1 = vector.load %arg3[%c0_1, %c0_2] : memref<128x512xbf16, #tpu.memory_space<vmem>>, vector<128x384xbf16>
    %cst = arith.constant dense<0.000000e+00> : vector<64x384xf32>
    %2 = tpu.matmul %0, %1, %cst {dimension_numbers = #tpu.dot_dimension_numbers<[1], [0], [0], [1], [0, 0, 1, 1], [], []>} : vector<64x128xbf16>, vector<128x384xbf16>, vector<64x384xf32> -> vector<64x384xf32>
    %3 = vector.extract_strided_slice %2 {offsets = [0, 0], sizes = [64, 128], strides = [1, 1]} : vector<64x384xf32> to vector<64x128xf32>
    %4 = vector.extract_strided_slice %2 {offsets = [0, 128], sizes = [64, 128], strides = [1, 1]} : vector<64x384xf32> to vector<64x128xf32>
    %5 = vector.extract_strided_slice %2 {offsets = [0, 256], sizes = [64, 128], strides = [1, 1]} : vector<64x384xf32> to vector<64x128xf32>
    %6 = tpu.iota {dimensions = array<i32: 0>} : vector<64x1xi32>
    %c16_i32 = arith.constant 16 : i32
    %c0_i32 = arith.constant 0 : i32
    %7 = arith.cmpi eq, %c16_i32, %c0_i32 : i32
    %c1_i32 = arith.constant 1 : i32
    %8 = arith.select %7, %c1_i32, %c16_i32 : i32
    %9 = vector.broadcast %8 : i32 to vector<64x1xi32>
    %10 = arith.remsi %6, %9 : vector<64x1xi32>
    %c0_i32_3 = arith.constant 0 : i32
    %11 = vector.broadcast %c0_i32_3 : i32 to vector<64x1xi32>
    %12 = arith.cmpi ne, %10, %11 : vector<64x1xi32>
    %c0_i32_4 = arith.constant 0 : i32
    %13 = vector.broadcast %c0_i32_4 : i32 to vector<64x1xi32>
    %14 = arith.cmpi slt, %10, %13 : vector<64x1xi32>
    %c0_i32_5 = arith.constant 0 : i32
    %15 = arith.cmpi slt, %8, %c0_i32_5 : i32
    %16 = vector.broadcast %15 : i1 to vector<64x1xi1>
    %17 = vector.broadcast %16 : vector<64x1xi1> to vector<64x1xi1>
    %18 = arith.xori %14, %17 : vector<64x1xi1>
    %19 = arith.andi %18, %12 : vector<64x1xi1>
    %20 = vector.broadcast %8 : i32 to vector<64x1xi32>
    %21 = arith.addi %10, %20 : vector<64x1xi32>
    %22 = arith.select %19, %21, %10 : vector<64x1xi1>, vector<64x1xi32>
    %c0_i32_6 = arith.constant 0 : i32
    %23 = vector.broadcast %c0_i32_6 : i32 to vector<64x1xi32>
    %24 = arith.cmpi eq, %22, %23 : vector<64x1xi32>
    %c1_i32_7 = arith.constant 1 : i32
    %25 = tpu.dynamic_rotate %3 by %c1_i32_7 dim 0 : vector<64x128xf32>, i32 -> vector<64x128xf32>
    %cst_8 = arith.constant 0.000000e+00 : f32
    %26 = vector.shape_cast %24 : vector<64x1xi1> to vector<64x1xi1>
    %27 = vector.broadcast %26 : vector<64x1xi1> to vector<64x128xi1>
    %28 = vector.broadcast %cst_8 : f32 to vector<64x128xf32>
    %29 = arith.select %27, %28, %25 : vector<64x128xi1>, vector<64x128xf32>
    %c15_i32 = arith.constant 15 : i32
    %30 = vector.broadcast %c15_i32 : i32 to vector<64x1xi32>
    %31 = arith.cmpi eq, %22, %30 : vector<64x1xi32>
    %c63_i32 = arith.constant 63 : i32
    %32 = tpu.dynamic_rotate %5 by %c63_i32 dim 0 : vector<64x128xf32>, i32 -> vector<64x128xf32>
    %cst_9 = arith.constant 0.000000e+00 : f32
    %33 = vector.shape_cast %31 : vector<64x1xi1> to vector<64x1xi1>
    %34 = vector.broadcast %33 : vector<64x1xi1> to vector<64x128xi1>
    %35 = vector.broadcast %cst_9 : f32 to vector<64x128xf32>
    %36 = arith.select %34, %35, %32 : vector<64x128xi1>, vector<64x128xf32>
    %37 = arith.addf %29, %4 : vector<64x128xf32>
    %38 = arith.addf %37, %36 : vector<64x128xf32>
    %c0_10 = arith.constant 0 : index
    %c0_11 = arith.constant 0 : index
    %39 = vector.load %arg2[%c0_10, %c0_11] : memref<64x128xf32, #tpu.memory_space<vmem>>, vector<64x128xf32>
    %40 = arith.addf %38, %39 : vector<64x128xf32>
    %cst_12 = arith.constant 0.000000e+00 : f32
    %41 = vector.broadcast %cst_12 : f32 to vector<64x128xf32>
    %42 = arith.maximumf %40, %41 : vector<64x128xf32>
    %43 = arith.truncf %42 : vector<64x128xf32> to vector<64x128xbf16>
    %c0_13 = arith.constant 0 : index
    %c384 = arith.constant 384 : index
    %44 = vector.load %arg3[%c0_13, %c384] : memref<128x512xbf16, #tpu.memory_space<vmem>>, vector<128x128xbf16>
    %cst_14 = arith.constant dense<0.000000e+00> : vector<64x128xf32>
    %45 = tpu.matmul %43, %44, %cst_14 {dimension_numbers = #tpu.dot_dimension_numbers<[1], [0], [0], [1], [0, 0, 1, 1], [], []>} : vector<64x128xbf16>, vector<128x128xbf16>, vector<64x128xf32> -> vector<64x128xf32>
    %c0_15 = arith.constant 0 : index
    %c0_16 = arith.constant 0 : index
    %46 = vector.load %arg4[%c0_15, %c0_16] : memref<64x128xf32, #tpu.memory_space<vmem>>, vector<64x128xf32>
    tpu.vector_store %arg4[%c0_15, %c0_16], %45 {strides = array<i32>} : memref<64x128xf32, #tpu.memory_space<vmem>>, vector<64x128xf32>,
    return
  }
  func.func @transform_0(%arg0: i32) -> (i32, i32) {
    %c0_i32 = arith.constant 0 : i32
    %c0_i32_0 = arith.constant 0 : i32
    return %arg0, %c0_i32 : i32, i32
  }
  func.func @transform_1(%arg0: i32) -> (i32, i32) {
    %c0_i32 = arith.constant 0 : i32
    %c0_i32_0 = arith.constant 0 : i32
    return %arg0, %c0_i32 : i32, i32
  }
  func.func @transform_2(%arg0: i32) -> (i32, i32) {
    %c0_i32 = arith.constant 0 : i32
    %c0_i32_0 = arith.constant 0 : i32
    %c0_i32_1 = arith.constant 0 : i32
    return %c0_i32, %c0_i32_0 : i32, i32
  }
  func.func @transform_3(%arg0: i32) -> (i32, i32) {
    %c0_i32 = arith.constant 0 : i32
    %c0_i32_0 = arith.constant 0 : i32
    return %arg0, %c0_i32 : i32, i32
  }
}

</mosaic_0001>

<llo_original>
// kernel: po_model_pallas.1
$region0: #{po_model_pallas.1}
  #allocation0 [shape = 'u32[]', space=smem, size = 0x4, offset = 0x4, fixed_abs, tag = 'smem constant byte address 0x4 - core index']
  #allocation1 [shape = 'u32[72,128]{1,0:T(1,128)}', space=vmem, size = 0x9000, scoped, tag = 'internal scratch']
  %s0 = inlined_call_operand.vmem [shape: bf16[64,128], index: 0, kind: input, shape index: {}]
  %s1 = inlined_call_operand.vmem [shape: f32[64,128], index: 1, kind: input, shape index: {}]
  %s2 = inlined_call_operand.vmem [shape: bf16[128,512], index: 2, kind: input, shape index: {}]
  %s3 = inlined_call_operand.vmem [shape: f32[64,128], index: 3, kind: output, shape index: {}]
  %s4 = sld [smem:[#allocation0]]
  $region22: #{po_model_pallas.1} parent=0
    _
  %s6 = ssub.s32 1, %s4
  %s7 = scalar_select 0, %s6, %s4
  // Predicated region
  $region2: #{po_model_pallas.1} parent=0 // pred_check
    _
  $region3: #{po_model_pallas.1} parent=0 // pred_check_branch
    %9 = sbr.rel (0) target = $region5
  $region4: #{po_model_pallas.1} parent=0 // pred_region
    _
  $region5: #{po_model_pallas.1} parent=0 // pred_fallthru
    _
  // Predicated region
  $region6: #{po_model_pallas.1} parent=0 // pred_check
    _
  $region7: #{po_model_pallas.1} parent=0 // pred_check_branch
    %11 = sbr.rel (0) target = $region9
  $region8: #{po_model_pallas.1} parent=0 // pred_region
    _
  $region9: #{po_model_pallas.1} parent=0 // pred_fallthru
    _
  // Predicated region
  $region10: #{po_model_pallas.1} parent=0 // pred_check
    _
  $region11: #{po_model_pallas.1} parent=0 // pred_check_branch
    %13 = sbr.rel (0) target = $region13
  $region12: #{po_model_pallas.1} parent=0 // pred_region
    _
  $region13: #{po_model_pallas.1} parent=0 // pred_fallthru
    _
  %v14 = vld [vmem:[%s0] sm:$0xf]
  %v15 = vld [vmem:[%s0 + $0x4] sm:$0xf]
  %v16 = vld [vmem:[%s0 + $0x8] sm:$0xf]
  %v17 = vld [vmem:[%s0 + $0xc] sm:$0xf]
  %v18 = vld [vmem:[%s0 + $0x10] sm:$0xf]
  %v19 = vld [vmem:[%s0 + $0x14] sm:$0xf]
  %v20 = vld [vmem:[%s0 + $0x18] sm:$0xf]
  %v21 = vld [vmem:[%s0 + $0x1c] sm:$0xf]
  %v22 = vld [vmem:[%s2] sm:$0xff]
  %v23 = vld [vmem:[%s2 + $0x8] sm:$0xf]
  %v24 = vld [vmem:[%s2 + $0x10] sm:$0xff]
  %v25 = vld [vmem:[%s2 + $0x18] sm:$0xf]
  %v26 = vld [vmem:[%s2 + $0x20] sm:$0xff]
  %v27 = vld [vmem:[%s2 + $0x28] sm:$0xf]
  %v28 = vld [vmem:[%s2 + $0x30] sm:$0xff]
  %v29 = vld [vmem:[%s2 + $0x38] sm:$0xf]
  %v30 = vld [vmem:[%s2 + $0x40] sm:$0xff]
  %v31 = vld [vmem:[%s2 + $0x48] sm:$0xf]
  %v32 = vld [vmem:[%s2 + $0x50] sm:$0xff]
  %v33 = vld [vmem:[%s2 + $0x58] sm:$0xf]
  %v34 = vld [vmem:[%s2 + $0x60] sm:$0xff]
  %v35 = vld [vmem:[%s2 + $0x68] sm:$0xf]
  %v36 = vld [vmem:[%s2 + $0x70] sm:$0xff]
  %v37 = vld [vmem:[%s2 + $0x78] sm:$0xf]
  %v38 = vld [vmem:[%s2 + $0x80] sm:$0xff]
  %v39 = vld [vmem:[%s2 + $0x88] sm:$0xf]
  %v40 = vld [vmem:[%s2 + $0x90] sm:$0xff]
  %v41 = vld [vmem:[%s2 + $0x98] sm:$0xf]
  %v42 = vld [vmem:[%s2 + $0xa0] sm:$0xff]
  %v43 = vld [vmem:[%s2 + $0xa8] sm:$0xf]
  %v44 = vld [vmem:[%s2 + $0xb0] sm:$0xff]
  %v45 = vld [vmem:[%s2 + $0xb8] sm:$0xf]
  %v46 = vld [vmem:[%s2 + $0xc0] sm:$0xff]
  %v47 = vld [vmem:[%s2 + $0xc8] sm:$0xf]
  %v48 = vld [vmem:[%s2 + $0xd0] sm:$0xff]
  %v49 = vld [vmem:[%s2 + $0xd8] sm:$0xf]
  %v50 = vld [vmem:[%s2 + $0xe0] sm:$0xff]
  %v51 = vld [vmem:[%s2 + $0xe8] sm:$0xf]
  %v52 = vld [vmem:[%s2 + $0xf0] sm:$0xff]
  %v53 = vld [vmem:[%s2 + $0xf8] sm:$0xf]
  %v62 = vunpack.c.l.b16 %v14
  %v63 = vunpack.c.l.b16 %v15
  %v64 = vunpack.c.l.b16 %v16
  %v65 = vunpack.c.l.b16 %v17
  %v66 = vunpack.c.l.b16 %v18
  %v67 = vunpack.c.l.b16 %v19
  %v68 = vunpack.c.l.b16 %v20
  %v69 = vunpack.c.l.b16 %v21
  %v70 = vpack.c.b16 %v63, %v62
  %v71 = vpack.c.b16 %v65, %v64
  %v72 = vpack.c.b16 %v67, %v66
  %v73 = vpack.c.b16 %v69, %v68
  %v110 = vunpack.c.l.b16 %v22
  %v111 = vunpack.c.h.b16 %v22
  %v112 = vunpack.c.l.b16 %v23
  %v113 = vunpack.c.l.b16 %v24
  %v114 = vunpack.c.h.b16 %v24
  %v115 = vunpack.c.l.b16 %v25
  %v116 = vunpack.c.l.b16 %v26
  %v117 = vunpack.c.h.b16 %v26
  %v118 = vunpack.c.l.b16 %v27
  %v119 = vunpack.c.l.b16 %v28
  %v120 = vunpack.c.h.b16 %v28
  %v121 = vunpack.c.l.b16 %v29
  %v122 = vunpack.c.l.b16 %v30
  %v123 = vunpack.c.h.b16 %v30
  %v124 = vunpack.c.l.b16 %v31
  %v125 = vunpack.c.l.b16 %v32
  %v126 = vunpack.c.h.b16 %v32
  %v127 = vunpack.c.l.b16 %v33
  %v128 = vunpack.c.l.b16 %v34
  %v129 = vunpack.c.h.b16 %v34
  %v130 = vunpack.c.l.b16 %v35
  %v131 = vunpack.c.l.b16 %v36
  %v132 = vunpack.c.h.b16 %v36
  %v133 = vunpack.c.l.b16 %v37
  %v134 = vunpack.c.l.b16 %v38
  %v135 = vunpack.c.h.b16 %v38
  %v136 = vunpack.c.l.b16 %v39
  %v137 = vunpack.c.l.b16 %v40
  %v138 = vunpack.c.h.b16 %v40
  %v139 = vunpack.c.l.b16 %v41
  %v140 = vunpack.c.l.b16 %v42
  %v141 = vunpack.c.h.b16 %v42
  %v142 = vunpack.c.l.b16 %v43
  %v143 = vunpack.c.l.b16 %v44
  %v144 = vunpack.c.h.b16 %v44
  %v145 = vunpack.c.l.b16 %v45
  %v146 = vunpack.c.l.b16 %v46
  %v147 = vunpack.c.h.b16 %v46
  %v148 = vunpack.c.l.b16 %v47
  %v149 = vunpack.c.l.b16 %v48
  %v150 = vunpack.c.h.b16 %v48
  %v151 = vunpack.c.l.b16 %v49
  %v152 = vunpack.c.l.b16 %v50
  %v153 = vunpack.c.h.b16 %v50
  %v154 = vunpack.c.l.b16 %v51
  %v155 = vunpack.c.l.b16 %v52
  %v156 = vunpack.c.h.b16 %v52
  %v157 = vunpack.c.l.b16 %v53
  %v158 = vpack.c.b16 %v113, %v110
  %v159 = vpack.c.b16 %v114, %v111
  %v160 = vpack.c.b16 %v115, %v112
  %v161 = vpack.c.b16 %v119, %v116
  %v162 = vpack.c.b16 %v120, %v117
  %v163 = vpack.c.b16 %v121, %v118
  %v164 = vpack.c.b16 %v125, %v122
  %v165 = vpack.c.b16 %v126, %v123
  %v166 = vpack.c.b16 %v127, %v124
  %v167 = vpack.c.b16 %v131, %v128
  %v168 = vpack.c.b16 %v132, %v129
  %v169 = vpack.c.b16 %v133, %v130
  %v170 = vpack.c.b16 %v137, %v134
  %v171 = vpack.c.b16 %v138, %v135
  %v172 = vpack.c.b16 %v139, %v136
  %v173 = vpack.c.b16 %v143, %v140
  %v174 = vpack.c.b16 %v144, %v141
  %v175 = vpack.c.b16 %v145, %v142
  %v176 = vpack.c.b16 %v149, %v146
  %v177 = vpack.c.b16 %v150, %v147
  %v178 = vpack.c.b16 %v151, %v148
  %v179 = vpack.c.b16 %v155, %v152
  %v180 = vpack.c.b16 %v156, %v153
  %v181 = vpack.c.b16 %v157, %v154
  %206 = vmatpush.bf16.msra.mxu0 %v179
  %207 = vmatpush.bf16.msra.mxu0 %v176
  %208 = vmatpush.bf16.msra.mxu0 %v173
  %209 = vmatpush.bf16.msra.mxu0 %v170
  %210 = vmatpush.bf16.msra.mxu0 %v167
  %211 = vmatpush.bf16.msra.mxu0 %v164
  %212 = vmatpush.bf16.msra.mxu0 %v161
  %213 = vmatpush.bf16.msra.mxu0 %v158
  %214 = vmatmul.bf16.gmra.mxu0 %v70
  %v215 = vpop.f32.mrf.mxu0
  %v216 = vadd.f32 0.0, %v215
  %v217 = vpop.f32.mrf.mxu0
  %v218 = vadd.f32 0.0, %v217
  %219 = vmatmul.bf16.gmra.mxu0 %v71
  %v220 = vpop.f32.mrf.mxu0
  %v221 = vadd.f32 0.0, %v220
  %v222 = vpop.f32.mrf.mxu0
  %v223 = vadd.f32 0.0, %v222
  %224 = vmatmul.bf16.gmra.mxu0 %v72
  %v225 = vpop.f32.mrf.mxu0
  %v226 = vadd.f32 0.0, %v225
  %v227 = vpop.f32.mrf.mxu0
  %v228 = vadd.f32 0.0, %v227
  %229 = vmatmul.bf16.gmra.mxu0 %v73
  %v230 = vpop.f32.mrf.mxu0
  %v231 = vadd.f32 0.0, %v230
  %v232 = vpop.f32.mrf.mxu0
  %v233 = vadd.f32 0.0, %v232
  %234 = vdwg.mxu0
  %235 = vmatpush.bf16.msra.mxu0 %v180
  %236 = vmatpush.bf16.msra.mxu0 %v177
  %237 = vmatpush.bf16.msra.mxu0 %v174
  %238 = vmatpush.bf16.msra.mxu0 %v171
  %239 = vmatpush.bf16.msra.mxu0 %v168
  %240 = vmatpush.bf16.msra.mxu0 %v165
  %241 = vmatpush.bf16.msra.mxu0 %v162
  %242 = vmatpush.bf16.msra.mxu0 %v159
  %243 = vmatmul.bf16.gmra.mxu0 %v70
  %v244 = vpop.f32.mrf.mxu0
  %v245 = vadd.f32 0.0, %v244
  %v246 = vpop.f32.mrf.mxu0
  %v247 = vadd.f32 0.0, %v246
  %248 = vmatmul.bf16.gmra.mxu0 %v71
  %v249 = vpop.f32.mrf.mxu0
  %v250 = vadd.f32 0.0, %v249
  %v251 = vpop.f32.mrf.mxu0
  %v252 = vadd.f32 0.0, %v251
  %253 = vmatmul.bf16.gmra.mxu0 %v72
  %v254 = vpop.f32.mrf.mxu0
  %v255 = vadd.f32 0.0, %v254
  %v256 = vpop.f32.mrf.mxu0
  %v257 = vadd.f32 0.0, %v256
  %258 = vmatmul.bf16.gmra.mxu0 %v73
  %v259 = vpop.f32.mrf.mxu0
  %v260 = vadd.f32 0.0, %v259
  %v261 = vpop.f32.mrf.mxu0
  %v262 = vadd.f32 0.0, %v261
  %263 = vdwg.mxu0
  %264 = vmatpush.bf16.msra.mxu0 %v181
  %265 = vmatpush.bf16.msra.mxu0 %v178
  %266 = vmatpush.bf16.msra.mxu0 %v175
  %267 = vmatpush.bf16.msra.mxu0 %v172
  %268 = vmatpush.bf16.msra.mxu0 %v169
  %269 = vmatpush.bf16.msra.mxu0 %v166
  %270 = vmatpush.bf16.msra.mxu0 %v163
  %271 = vmatpush.bf16.msra.mxu0 %v160
  %272 = vmatmul.bf16.gmra.mxu0 %v70
  %v273 = vpop.f32.mrf.mxu0
  %v274 = vadd.f32 0.0, %v273
  %v275 = vpop.f32.mrf.mxu0
  %v276 = vadd.f32 0.0, %v275
  %277 = vmatmul.bf16.gmra.mxu0 %v71
  %v278 = vpop.f32.mrf.mxu0
  %v279 = vadd.f32 0.0, %v278
  %v280 = vpop.f32.mrf.mxu0
  %v281 = vadd.f32 0.0, %v280
  %282 = vmatmul.bf16.gmra.mxu0 %v72
  %v283 = vpop.f32.mrf.mxu0
  %v284 = vadd.f32 0.0, %v283
  %v285 = vpop.f32.mrf.mxu0
  %v286 = vadd.f32 0.0, %v285
  %287 = vmatmul.bf16.gmra.mxu0 %v73
  %v288 = vpop.f32.mrf.mxu0
  %v289 = vadd.f32 0.0, %v288
  %v290 = vpop.f32.mrf.mxu0
  %v291 = vadd.f32 0.0, %v290
  %292 = vdwg.mxu0
  %v293 = vlaneseq
  %v294 = vshrl.u32 %v293, 7
  %v295 = vadd.s32 %v294, 8
  %v296 = vadd.s32 %v294, 16
  %v297 = vadd.s32 %v294, 24
  %v298 = vadd.s32 %v294, 32
  %v299 = vadd.s32 %v294, 40
  %v300 = vadd.s32 %v294, 48
  %v301 = vadd.s32 %v294, 56
  %vm302 = vcmp.lt.s32.totalorder %v294, 0
  %v303 = vsub.s32 0, %v294
  %v304 = vsel %vm302, %v303, %v294
  %v305 = vshrl.u32 %v304, 4
  %v306 = vand.u32 %v304, 15
  %v307 = vsub.s32 0, %v306
  %v308 = vsel %vm302, %v307, %v306
  %vm309 = vcmp.lt.s32.totalorder %v295, 0
  %v310 = vsub.s32 0, %v295
  %v311 = vsel %vm309, %v310, %v295
  %v312 = vshrl.u32 %v311, 4
  %v313 = vand.u32 %v311, 15
  %v314 = vsub.s32 0, %v313
  %v315 = vsel %vm309, %v314, %v313
  %vm316 = vcmp.lt.s32.totalorder %v296, 0
  %v317 = vsub.s32 0, %v296
  %v318 = vsel %vm316, %v317, %v296
  %v319 = vshrl.u32 %v318, 4
  %v320 = vand.u32 %v318, 15
  %v321 = vsub.s32 0, %v320
  %v322 = vsel %vm316, %v321, %v320
  %vm323 = vcmp.lt.s32.totalorder %v297, 0
  %v324 = vsub.s32 0, %v297
  %v325 = vsel %vm323, %v324, %v297
  %v326 = vshrl.u32 %v325, 4
  %v327 = vand.u32 %v325, 15
  %v328 = vsub.s32 0, %v327
  %v329 = vsel %vm323, %v328, %v327
  %vm330 = vcmp.lt.s32.totalorder %v298, 0
  %v331 = vsub.s32 0, %v298
  %v332 = vsel %vm330, %v331, %v298
  %v333 = vshrl.u32 %v332, 4
  %v334 = vand.u32 %v332, 15
  %v335 = vsub.s32 0, %v334
  %v336 = vsel %vm330, %v335, %v334
  %vm337 = vcmp.lt.s32.totalorder %v299, 0
  %v338 = vsub.s32 0, %v299
  %v339 = vsel %vm337, %v338, %v299
  %v340 = vshrl.u32 %v339, 4
  %v341 = vand.u32 %v339, 15
  %v342 = vsub.s32 0, %v341
  %v343 = vsel %vm337, %v342, %v341
  %vm344 = vcmp.lt.s32.totalorder %v300, 0
  %v345 = vsub.s32 0, %v300
  %v346 = vsel %vm344, %v345, %v300
  %v347 = vshrl.u32 %v346, 4
  %v348 = vand.u32 %v346, 15
  %v349 = vsub.s32 0, %v348
  %v350 = vsel %vm344, %v349, %v348
  %vm351 = vcmp.lt.s32.totalorder %v301, 0
  %v352 = vsub.s32 0, %v301
  %v353 = vsel %vm351, %v352, %v301
  %v354 = vshrl.u32 %v353, 4
  %v355 = vand.u32 %v353, 15
  %v356 = vsub.s32 0, %v355
  %v357 = vsel %vm351, %v356, %v355
  %vm358 = vcmp.ne.s32.totalorder %v308, 0
  %vm359 = vcmp.ne.s32.totalorder %v315, 0
  %vm360 = vcmp.ne.s32.totalorder %v322, 0
  %vm361 = vcmp.ne.s32.totalorder %v329, 0
  %vm362 = vcmp.ne.s32.totalorder %v336, 0
  %vm363 = vcmp.ne.s32.totalorder %v343, 0
  %vm364 = vcmp.ne.s32.totalorder %v350, 0
  %vm365 = vcmp.ne.s32.totalorder %v357, 0
  %vm366 = vcmp.lt.s32.totalorder %v308, 0
  %vm367 = vcmp.lt.s32.totalorder %v315, 0
  %vm368 = vcmp.lt.s32.totalorder %v322, 0
  %vm369 = vcmp.lt.s32.totalorder %v329, 0
  %vm370 = vcmp.lt.s32.totalorder %v336, 0
  %vm371 = vcmp.lt.s32.totalorder %v343, 0
  %vm372 = vcmp.lt.s32.totalorder %v350, 0
  %vm373 = vcmp.lt.s32.totalorder %v357, 0
  %vm374 = vmand %vm366, %vm358
  %vm375 = vmand %vm367, %vm359
  %vm376 = vmand %vm368, %vm360
  %vm377 = vmand %vm369, %vm361
  %vm378 = vmand %vm370, %vm362
  %vm379 = vmand %vm371, %vm363
  %vm380 = vmand %vm372, %vm364
  %vm381 = vmand %vm373, %vm365
  %v382 = vadd.s32 %v308, 16
  %v383 = vadd.s32 %v315, 16
  %v384 = vadd.s32 %v322, 16
  %v385 = vadd.s32 %v329, 16
  %v386 = vadd.s32 %v336, 16
  %v387 = vadd.s32 %v343, 16
  %v388 = vadd.s32 %v350, 16
  %v389 = vadd.s32 %v357, 16
  %v390 = vsel %vm374, %v382, %v308
  %v391 = vsel %vm375, %v383, %v315
  %v392 = vsel %vm376, %v384, %v322
  %v393 = vsel %vm377, %v385, %v329
  %v394 = vsel %vm378, %v386, %v336
  %v395 = vsel %vm379, %v387, %v343
  %v396 = vsel %vm380, %v388, %v350
  %v397 = vsel %vm381, %v389, %v357
  %vm398 = vcmp.eq.s32.totalorder %v390, 0
  %vm399 = vcmp.eq.s32.totalorder %v391, 0
  %vm400 = vcmp.eq.s32.totalorder %v392, 0
  %vm401 = vcmp.eq.s32.totalorder %v393, 0
  %vm402 = vcmp.eq.s32.totalorder %v394, 0
  %vm403 = vcmp.eq.s32.totalorder %v395, 0
  %vm404 = vcmp.eq.s32.totalorder %v396, 0
  %vm405 = vcmp.eq.s32.totalorder %v397, 0
  %v406 = vrot.slane %v216, 7
  %v407 = vrot.slane %v218, 7
  %v408 = vrot.slane %v221, 7
  %v409 = vrot.slane %v223, 7
  %v410 = vrot.slane %v226, 7
  %v411 = vrot.slane %v228, 7
  %v412 = vrot.slane %v231, 7
  %v413 = vrot.slane %v233, 7
  %vm414 = vcmp.lt.s32.totalorder %v294, 1
  %v415 = vsel %vm414, %v412, %v413
  %v416 = vsel %vm414, %v411, %v412
  %v417 = vsel %vm414, %v410, %v411
  %v418 = vsel %vm414, %v409, %v410
  %v419 = vsel %vm414, %v408, %v409
  %v420 = vsel %vm414, %v407, %v408
  %v421 = vsel %vm414, %v406, %v407
  %v422 = vsel %vm414, %v413, %v406
  %v423 = vsel %vm398, 1, 0
  %v424 = vsel %vm399, 1, 0
  %v425 = vsel %vm400, 1, 0
  %v426 = vsel %vm401, 1, 0
  %v427 = vsel %vm402, 1, 0
  %v428 = vsel %vm403, 1, 0
  %v429 = vsel %vm404, 1, 0
  %v430 = vsel %vm405, 1, 0
  %vm431 = vcmp.eq.s32.totalorder %v423, 1
  %vm432 = vcmp.eq.s32.totalorder %v424, 1
  %vm433 = vcmp.eq.s32.totalorder %v425, 1
  %vm434 = vcmp.eq.s32.totalorder %v426, 1
  %vm435 = vcmp.eq.s32.totalorder %v427, 1
  %vm436 = vcmp.eq.s32.totalorder %v428, 1
  %vm437 = vcmp.eq.s32.totalorder %v429, 1
  %vm438 = vcmp.eq.s32.totalorder %v430, 1
  %v439 = vsel %vm431, 0.0, %v422
  %v440 = vsel %vm432, 0.0, %v421
  %v441 = vsel %vm433, 0.0, %v420
  %v442 = vsel %vm434, 0.0, %v419
  %v443 = vsel %vm435, 0.0, %v418
  %v444 = vsel %vm436, 0.0, %v417
  %v445 = vsel %vm437, 0.0, %v416
  %v446 = vsel %vm438, 0.0, %v415
  %vm447 = vcmp.eq.s32.totalorder %v390, 15
  %vm448 = vcmp.eq.s32.totalorder %v391, 15
  %vm449 = vcmp.eq.s32.totalorder %v392, 15
  %vm450 = vcmp.eq.s32.totalorder %v393, 15
  %vm451 = vcmp.eq.s32.totalorder %v394, 15
  %vm452 = vcmp.eq.s32.totalorder %v395, 15
  %vm453 = vcmp.eq.s32.totalorder %v396, 15
  %vm454 = vcmp.eq.s32.totalorder %v397, 15
  %v455 = vrot.slane %v274, 1
  %v456 = vrot.slane %v276, 1
  %v457 = vrot.slane %v279, 1
  %v458 = vrot.slane %v281, 1
  %v459 = vrot.slane %v284, 1
  %v460 = vrot.slane %v286, 1
  %v461 = vrot.slane %v289, 1
  %v462 = vrot.slane %v291, 1
  %vm463 = vcmp.lt.s32.totalorder %v294, 7
  %v464 = vsel %vm463, %v461, %v462
  %v465 = vsel %vm463, %v460, %v461
  %v466 = vsel %vm463, %v459, %v460
  %v467 = vsel %vm463, %v458, %v459
  %v468 = vsel %vm463, %v457, %v458
  %v469 = vsel %vm463, %v456, %v457
  %v470 = vsel %vm463, %v455, %v456
  %v471 = vsel %vm463, %v462, %v455
  %v472 = vsel %vm447, 1, 0
  %v473 = vsel %vm448, 1, 0
  %v474 = vsel %vm449, 1, 0
  %v475 = vsel %vm450, 1, 0
  %v476 = vsel %vm451, 1, 0
  %v477 = vsel %vm452, 1, 0
  %v478 = vsel %vm453, 1, 0
  %v479 = vsel %vm454, 1, 0
  %vm480 = vcmp.eq.s32.totalorder %v472, 1
  %vm481 = vcmp.eq.s32.totalorder %v473, 1
  %vm482 = vcmp.eq.s32.totalorder %v474, 1
  %vm483 = vcmp.eq.s32.totalorder %v475, 1
  %vm484 = vcmp.eq.s32.totalorder %v476, 1
  %vm485 = vcmp.eq.s32.totalorder %v477, 1
  %vm486 = vcmp.eq.s32.totalorder %v478, 1
  %vm487 = vcmp.eq.s32.totalorder %v479, 1
  %v488 = vsel %vm480, 0.0, %v470
  %v489 = vsel %vm481, 0.0, %v469
  %v490 = vsel %vm482, 0.0, %v468
  %v491 = vsel %vm483, 0.0, %v467
  %v492 = vsel %vm484, 0.0, %v466
  %v493 = vsel %vm485, 0.0, %v465
  %v494 = vsel %vm486, 0.0, %v464
  %v495 = vsel %vm487, 0.0, %v471
  %v496 = vadd.f32 %v439, %v245
  %v497 = vadd.f32 %v440, %v247
  %v498 = vadd.f32 %v441, %v250
  %v499 = vadd.f32 %v442, %v252
  %v500 = vadd.f32 %v443, %v255
  %v501 = vadd.f32 %v444, %v257
  %v502 = vadd.f32 %v445, %v260
  %v503 = vadd.f32 %v446, %v262
  %v504 = vadd.f32 %v496, %v488
  %v505 = vadd.f32 %v497, %v489
  %v506 = vadd.f32 %v498, %v490
  %v507 = vadd.f32 %v499, %v491
  %v508 = vadd.f32 %v500, %v492
  %v509 = vadd.f32 %v501, %v493
  %v510 = vadd.f32 %v502, %v494
  %v511 = vadd.f32 %v503, %v495
  %v512 = vld [vmem:[%s1] sm:$0xff]
  %v513 = vld [vmem:[%s1 + $0x8] sm:$0xff]
  %v514 = vld [vmem:[%s1 + $0x10] sm:$0xff]
  %v515 = vld [vmem:[%s1 + $0x18] sm:$0xff]
  %v516 = vld [vmem:[%s1 + $0x20] sm:$0xff]
  %v517 = vld [vmem:[%s1 + $0x28] sm:$0xff]
  %v518 = vld [vmem:[%s1 + $0x30] sm:$0xff]
  %v519 = vld [vmem:[%s1 + $0x38] sm:$0xff]
  %v520 = vadd.f32 %v504, %v512
  %v521 = vadd.f32 %v505, %v513
  %v522 = vadd.f32 %v506, %v514
  %v523 = vadd.f32 %v507, %v515
  %v524 = vadd.f32 %v508, %v516
  %v525 = vadd.f32 %v509, %v517
  %v526 = vadd.f32 %v510, %v518
  %v527 = vadd.f32 %v511, %v519
  %v528 = vmax.f32 %v520, 0.0
  %v529 = vmax.f32 %v521, 0.0
  %v530 = vmax.f32 %v522, 0.0
  %v531 = vmax.f32 %v523, 0.0
  %v532 = vmax.f32 %v524, 0.0
  %v533 = vmax.f32 %v525, 0.0
  %v534 = vmax.f32 %v526, 0.0
  %v535 = vmax.f32 %v527, 0.0
  %v536 = vpack.c.bf16 %v529, %v528
  %v537 = vpack.c.bf16 %v531, %v530
  %v538 = vpack.c.bf16 %v533, %v532
  %v539 = vpack.c.bf16 %v535, %v534
  %v540 = vld [vmem:[%s2 + $0xc] sm:$0xf]
  %v541 = vld [vmem:[%s2 + $0x1c] sm:$0xf]
  %v542 = vld [vmem:[%s2 + $0x2c] sm:$0xf]
  %v543 = vld [vmem:[%s2 + $0x3c] sm:$0xf]
  %v544 = vld [vmem:[%s2 + $0x4c] sm:$0xf]
  %v545 = vld [vmem:[%s2 + $0x5c] sm:$0xf]
  %v546 = vld [vmem:[%s2 + $0x6c] sm:$0xf]
  %v547 = vld [vmem:[%s2 + $0x7c] sm:$0xf]
  %v548 = vld [vmem:[%s2 + $0x8c] sm:$0xf]
  %v549 = vld [vmem:[%s2 + $0x9c] sm:$0xf]
  %v550 = vld [vmem:[%s2 + $0xac] sm:$0xf]
  %v551 = vld [vmem:[%s2 + $0xbc] sm:$0xf]
  %v552 = vld [vmem:[%s2 + $0xcc] sm:$0xf]
  %v553 = vld [vmem:[%s2 + $0xdc] sm:$0xf]
  %v554 = vld [vmem:[%s2 + $0xec] sm:$0xf]
  %v555 = vld [vmem:[%s2 + $0xfc] sm:$0xf]
  %v572 = vunpack.c.l.b16 %v540
  %v573 = vunpack.c.l.b16 %v541
  %v574 = vunpack.c.l.b16 %v542
  %v575 = vunpack.c.l.b16 %v543
  %v576 = vunpack.c.l.b16 %v544
  %v577 = vunpack.c.l.b16 %v545
  %v578 = vunpack.c.l.b16 %v546
  %v579 = vunpack.c.l.b16 %v547
  %v580 = vunpack.c.l.b16 %v548
  %v581 = vunpack.c.l.b16 %v549
  %v582 = vunpack.c.l.b16 %v550
  %v583 = vunpack.c.l.b16 %v551
  %v584 = vunpack.c.l.b16 %v552
  %v585 = vunpack.c.l.b16 %v553
  %v586 = vunpack.c.l.b16 %v554
  %v587 = vunpack.c.l.b16 %v555
  %v588 = vpack.c.b16 %v573, %v572
  %v589 = vpack.c.b16 %v575, %v574
  %v590 = vpack.c.b16 %v577, %v576
  %v591 = vpack.c.b16 %v579, %v578
  %v592 = vpack.c.b16 %v581, %v580
  %v593 = vpack.c.b16 %v583, %v582
  %v594 = vpack.c.b16 %v585, %v584
  %v595 = vpack.c.b16 %v587, %v586
  %604 = vmatpush.bf16.msra.mxu0 %v595
  %605 = vmatpush.bf16.msra.mxu0 %v594
  %606 = vmatpush.bf16.msra.mxu0 %v593
  %607 = vmatpush.bf16.msra.mxu0 %v592
  %608 = vmatpush.bf16.msra.mxu0 %v591
  %609 = vmatpush.bf16.msra.mxu0 %v590
  %610 = vmatpush.bf16.msra.mxu0 %v589
  %611 = vmatpush.bf16.msra.mxu0 %v588
  %612 = vmatmul.bf16.gmra.mxu0 %v536
  %v613 = vpop.f32.mrf.mxu0
  %v614 = vadd.f32 0.0, %v613
  %v615 = vpop.f32.mrf.mxu0
  %v616 = vadd.f32 0.0, %v615
  %617 = vmatmul.bf16.gmra.mxu0 %v537
  %v618 = vpop.f32.mrf.mxu0
  %v619 = vadd.f32 0.0, %v618
  %v620 = vpop.f32.mrf.mxu0
  %v621 = vadd.f32 0.0, %v620
  %622 = vmatmul.bf16.gmra.mxu0 %v538
  %v623 = vpop.f32.mrf.mxu0
  %v624 = vadd.f32 0.0, %v623
  %v625 = vpop.f32.mrf.mxu0
  %v626 = vadd.f32 0.0, %v625
  %627 = vmatmul.bf16.gmra.mxu0 %v539
  %v628 = vpop.f32.mrf.mxu0
  %v629 = vadd.f32 0.0, %v628
  %v630 = vpop.f32.mrf.mxu0
  %v631 = vadd.f32 0.0, %v630
  %632 = vdwg.mxu0
  %633 = vst [vmem:[%s3] sm:$0xff] %v614
  %634 = vst [vmem:[%s3 + $0x8] sm:$0xff] %v616
  %635 = vst [vmem:[%s3 + $0x10] sm:$0xff] %v619
  %636 = vst [vmem:[%s3 + $0x18] sm:$0xff] %v621
  %637 = vst [vmem:[%s3 + $0x20] sm:$0xff] %v624
  %638 = vst [vmem:[%s3 + $0x28] sm:$0xff] %v626
  %639 = vst [vmem:[%s3 + $0x30] sm:$0xff] %v629
  %640 = vst [vmem:[%s3 + $0x38] sm:$0xff] %v631
  // Predicated region
  $region14: #{po_model_pallas.1} parent=0 // pred_check
    _
  $region15: #{po_model_pallas.1} parent=0 // pred_check_branch
    %642 = sbr.rel (0) target = $region17
  $region16: #{po_model_pallas.1} parent=0 // pred_region
    _
  $region17: #{po_model_pallas.1} parent=0 // pred_fallthru
    _
  // Predicated region
  $region18: #{po_model_pallas.1} parent=0 // pred_check
    _
  $region19: #{po_model_pallas.1} parent=0 // pred_check_branch
    %644 = sbr.rel (0) target = $region21
  $region20: #{po_model_pallas.1} parent=0 // pred_region
    _
  $region21: #{po_model_pallas.1} parent=0 // pred_fallthru
    _

</llo_original>
